<compile_context>
chip_gen: v5e
topology: v5e:2x2
jax: 0.10.0
libtpu: 0.0.40
codegen_flags: <defaults>
</compile_context>

<pallas_src>
import numpy as np
import jax
import jax.numpy as jnp
from jax.experimental import pallas as pl
from jax.experimental.pallas import tpu as pltpu

BN_EPS = 1e-5


def _round_up(x, m):
    return ((x + m - 1) // m) * m


# ---------------------------------------------------------------------------
# Pass 1: fused K-contraction matmul + per-tile BN partial statistics
# ---------------------------------------------------------------------------
def _matmul_stats_kernel(x_ref, w_ref, y_ref, sum_ref, sumsq_ref):
    """x_ref:     (TN, Kc_pad)      bf16/f32  gathered+repacked features for this N tile
       w_ref:     (Kc_pad, C_pad)   bf16/f32  whole repacked weight (resident, one block)
       y_ref:     (TN, C_pad)       f32       pre-BN conv output tile
       sum_ref:   (1, 8, C_pad)     f32       per-tile sum   (row 0 valid, broadcast to 8)
       sumsq_ref: (1, 8, C_pad)     f32       per-tile sumsq (row 0 valid, broadcast to 8)
    """
    y = jnp.dot(x_ref[...], w_ref[...], preferred_element_type=jnp.float32)
    y_ref[...] = y

    c = sum_ref.shape[-1]
    s = jnp.sum(y, axis=0, keepdims=True)          # (1, C_pad); padded rows are zero
    ss = jnp.sum(y * y, axis=0, keepdims=True)     # (1, C_pad)
    sum_ref[0] = jnp.broadcast_to(s, (8, c))
    sumsq_ref[0] = jnp.broadcast_to(ss, (8, c))


# ---------------------------------------------------------------------------
# Pass 2: normalize (folded BN scale/shift) + ReLU
# ---------------------------------------------------------------------------
def _bn_relu_kernel(y_ref, scale_ref, shift_ref, o_ref):
    """y_ref: (TN, C_pad) f32; scale/shift: (1, C_pad) f32; o_ref: (TN, C_pad) f32."""
    o_ref[...] = jnp.maximum(
        y_ref[...] * scale_ref[...] + shift_ref[...], 0.0
    ).astype(o_ref.dtype)


def basic_deconvolution_block(feats, idx, weight, gamma, beta,
                              *, tile_n=2048, mxu_dtype=jnp.bfloat16):
    """feats:  [N, C_in]   sparse voxel features (SparseTensor.F layout)
       idx:    [K, N]      transposed-conv kernel map (-1 where no neighbor)
       weight: [K, C_in, C_out]  torchsparse Conv3d weight
       gamma/beta: [C_out] BatchNorm1d affine params
       returns [N, C_out]  (training-mode BN, ReLU)
    """
    N, C_in = feats.shape
    K = weight.shape[0]
    C_out = weight.shape[-1]
    Kc = K * C_in

    # Glue (outside the kernel): gather + lane-dense repack to [N, K*C_in].
    g = gather_features(feats, idx)                             # [K, N, C_in]
    x = jnp.transpose(g, (1, 0, 2)).reshape(N, Kc)              # [N, K*C_in]
    w = weight.reshape(Kc, C_out)                               # [K*C_in, C_out]

    # Padded, lane-dense shapes.
    Kc_pad = _round_up(Kc, 128)
    C_pad = _round_up(max(C_out, 128), 128)
    tn = min(tile_n, _round_up(N, 8))                           # multiple of 8
    N_pad = _round_up(N, tn)
    n_tiles = N_pad // tn

    x_p = jnp.zeros((N_pad, Kc_pad), mxu_dtype).at[:N, :Kc].set(x.astype(mxu_dtype))
    w_p = jnp.zeros((Kc_pad, C_pad), mxu_dtype).at[:Kc, :C_out].set(w.astype(mxu_dtype))

    # ---- Pass 1: y = x @ w  (+ per-tile sum / sumsq) -----------------------
    y, sums, sumsqs = pl.pallas_call(
        _matmul_stats_kernel,
        out_shape=(
            jax.ShapeDtypeStruct((N_pad, C_pad), jnp.float32),
            jax.ShapeDtypeStruct((n_tiles, 8, C_pad), jnp.float32),
            jax.ShapeDtypeStruct((n_tiles, 8, C_pad), jnp.float32),
        ),
        grid_spec=pltpu.PrefetchScalarGridSpec(
            num_scalar_prefetch=0,
            grid=(n_tiles,),
            in_specs=[
                pl.BlockSpec((tn, Kc_pad), lambda i: (i, 0)),
                pl.BlockSpec((Kc_pad, C_pad), lambda i: (0, 0)),   # whole weight, one block
            ],
            out_specs=[
                pl.BlockSpec((tn, C_pad), lambda i: (i, 0)),
                pl.BlockSpec((1, 8, C_pad), lambda i: (i, 0, 0)),
                pl.BlockSpec((1, 8, C_pad), lambda i: (i, 0, 0)),
            ],
        ),
        compiler_params=pltpu.CompilerParams(dimension_semantics=("parallel",)),
    )(x_p, w_p)

    # ---- Finalize global BN statistics (tiny, plain JAX) -------------------
    total_sum = sums[:, 0, :].sum(axis=0)            # (C_pad,)
    total_sumsq = sumsqs[:, 0, :].sum(axis=0)        # (C_pad,)
    n = jnp.float32(N)
    mean = total_sum / n
    var = total_sumsq / n - mean * mean              # biased var (BN training)
    gamma_p = jnp.zeros((C_pad,), jnp.float32).at[:C_out].set(gamma.astype(jnp.float32))
    beta_p = jnp.zeros((C_pad,), jnp.float32).at[:C_out].set(beta.astype(jnp.float32))
    scale = gamma_p * jax.lax.rsqrt(var + BN_EPS)
    shift = beta_p - mean * scale
    scale2 = scale.reshape(1, C_pad)
    shift2 = shift.reshape(1, C_pad)

    # ---- Pass 2: normalize + ReLU ------------------------------------------
    out = pl.pallas_call(
        _bn_relu_kernel,
        out_shape=jax.ShapeDtypeStruct((N_pad, C_pad), jnp.float32),
        grid_spec=pltpu.PrefetchScalarGridSpec(
            num_scalar_prefetch=0,
            grid=(n_tiles,),
            in_specs=[
                pl.BlockSpec((tn, C_pad), lambda i: (i, 0)),
                pl.BlockSpec((1, C_pad), lambda i: (0, 0)),
                pl.BlockSpec((1, C_pad), lambda i: (0, 0)),
            ],
            out_specs=pl.BlockSpec((tn, C_pad), lambda i: (i, 0)),
        ),
        compiler_params=pltpu.CompilerParams(dimension_semantics=("parallel",)),
    )(y, scale2, shift2)

    return out[:N, :C_out]


# ---------------------------------------------------------------------------
# Glue: kernel-offset enumeration, kernel map (coordinate hashing) and gather.
# ---------------------------------------------------------------------------
def kernel_offsets(ks):
    r = np.arange(ks) - (ks - 1) // 2  # symmetric offsets for odd ks, e.g. [-1,0,1]
    ox, oy, oz = np.meshgrid(r, r, r, indexing="ij")
    return np.stack([ox.ravel(), oy.ravel(), oz.ravel()], axis=1).astype(np.int32)


def build_transposed_kernel_map(coords, offsets):
    """For stride=1 transposed conv the output coordinate set equals the input set.
    idx[k, j] = index i of the input point at (coord_j - offset_k), or -1 if absent."""
    table = {tuple(c): i for i, c in enumerate(coords.tolist())}
    K, N = offsets.shape[0], coords.shape[0]
    idx = np.full((K, N), -1, dtype=np.int32)
    for k in range(K):
        off = offsets[k]
        for j in range(N):
            nb = tuple((coords[j] - off).tolist())
            if nb in table:
                idx[k, j] = table[nb]
    return idx


def gather_features(feats, idx):
    """feats: [N, C_in], idx: [K, N]  ->  [K, N, C_in] with zeros where idx < 0."""
    mask = idx >= 0
    safe = jnp.clip(idx, 0, feats.shape[0] - 1)
    g = jnp.take(feats, safe, axis=0)              # [K, N, C_in]
    return jnp.where(mask[..., None], g, 0.0)


def reference_forward(feats, idx, weight, gamma, beta, mxu_dtype=jnp.bfloat16):
    """Straightforward JAX reference with the same bf16 MXU inputs / f32 accumulation."""
    g = gather_features(feats, idx)
    y = jnp.einsum("knc,kcd->nd", g.astype(mxu_dtype), weight.astype(mxu_dtype),
                   preferred_element_type=jnp.float32)
    mean = jnp.mean(y, axis=0, keepdims=True)
    var = jnp.mean((y - mean) ** 2, axis=0, keepdims=True)
    y_hat = (y - mean) / jnp.sqrt(var + BN_EPS)
    return jnp.maximum(y_hat * gamma[None, :] + beta[None, :], 0.0)


if __name__ == "__main__":
    key = jax.random.PRNGKey(0)

    # Module config: BasicDeconvolutionBlock(inc=8, outc=16, ks=3, stride=1)
    inc, outc, ks = 8, 16, 3
    K = ks ** 3
    N = 64           # number of occupied voxels (sparse points)
    grid = 8         # synthetic voxel grid extent

    # Deterministic sparse coordinates (unique voxels in an 8^3 grid).
    rng = np.random.RandomState(0)
    lin = rng.choice(grid ** 3, size=N, replace=False)
    coords = np.stack([lin // (grid * grid), (lin // grid) % grid, lin % grid],
                      axis=1).astype(np.int32)

    # Deterministic parameters (torchsparse Conv3d weight: [K, inc, outc]).
    k_f, k_w = jax.random.split(key)
    feats = jax.random.normal(k_f, (N, inc), dtype=jnp.float32)
    fan = inc * K
    weight = jax.random.normal(k_w, (K, inc, outc), dtype=jnp.float32) / np.sqrt(fan)
    gamma = jnp.ones((outc,), dtype=jnp.float32)   # BatchNorm1d init
    beta = jnp.zeros((outc,), dtype=jnp.float32)

    # Glue: kernel map, then the Pallas hot path.
    offsets = kernel_offsets(ks)
    idx = jnp.asarray(build_transposed_kernel_map(coords, offsets))

    out = basic_deconvolution_block(feats, idx, weight, gamma, beta)
    out = jax.block_until_ready(out)

    ref = jax.block_until_ready(reference_forward(feats, idx, weight, gamma, beta))
    np.testing.assert_allclose(np.asarray(out), np.asarray(ref), rtol=1e-3, atol=1e-3)

    print("KERNEL_OK")
</pallas_src>

<mosaic_0001>
module attributes {stable_mosaic.version = 11 : i64} {
  func.func @_matmul_stats_kernel(%arg0: i32, %arg1: memref<64x256xbf16, #tpu.memory_space<vmem>>, %arg2: memref<256x128xbf16, #tpu.memory_space<vmem>>, %arg3: memref<64x128xf32, #tpu.memory_space<vmem>>, %arg4: memref<1x8x128xf32, #tpu.memory_space<vmem>>, %arg5: memref<1x8x128xf32, #tpu.memory_space<vmem>>) attributes {dimension_semantics = [#tpu.dimension_semantics<parallel>], iteration_bounds = array<i64: 1>, scalar_prefetch = 0 : i64, scratch_operands = 0 : i64, tpu.core_type = #tpu.core_type<tc>, window_params = [{transform_indices = @transform_0, window_bounds = array<i64: 64, 256>}, {pipeline_mode = #tpu.pipeline_mode<synchronous>, transform_indices = @transform_1, window_bounds = array<i64: 256, 128>}, {transform_indices = @transform_2, window_bounds = array<i64: 64, 128>}, {transform_indices = @transform_3, window_bounds = array<i64: 1, 8, 128>}, {transform_indices = @transform_4, window_bounds = array<i64: 1, 8, 128>}]} {
    %c0 = arith.constant 0 : index
    %c0_0 = arith.constant 0 : index
    %0 = vector.load %arg1[%c0, %c0_0] : memref<64x256xbf16, #tpu.memory_space<vmem>>, vector<64x256xbf16>
    %c0_1 = arith.constant 0 : index
    %c0_2 = arith.constant 0 : index
    %1 = vector.load %arg2[%c0_1, %c0_2] : memref<256x128xbf16, #tpu.memory_space<vmem>>, vector<256x128xbf16>
    %cst = arith.constant dense<0.000000e+00> : vector<64x128xf32>
    %2 = tpu.matmul %0, %1, %cst {dimension_numbers = #tpu.dot_dimension_numbers<[1], [0], [0], [1], [0, 0, 1, 1], [], []>} : vector<64x256xbf16>, vector<256x128xbf16>, vector<64x128xf32> -> vector<64x128xf32>
    %c0_3 = arith.constant 0 : index
    %c0_4 = arith.constant 0 : index
    %3 = vector.load %arg3[%c0_3, %c0_4] : memref<64x128xf32, #tpu.memory_space<vmem>>, vector<64x128xf32>
    tpu.vector_store %arg3[%c0_3, %c0_4], %2 {strides = array<i32>} : memref<64x128xf32, #tpu.memory_space<vmem>>, vector<64x128xf32>,
    %cst_5 = arith.constant dense<0.000000e+00> : vector<128xf32>
    %4 = vector.multi_reduction <add>, %2, %cst_5 [0] : vector<64x128xf32> to vector<128xf32>
    %5 = vector.shape_cast %4 : vector<128xf32> to vector<1x128xf32>
    %6 = arith.mulf %2, %2 : vector<64x128xf32>
    %cst_6 = arith.constant dense<0.000000e+00> : vector<128xf32>
    %7 = vector.multi_reduction <add>, %6, %cst_6 [0] : vector<64x128xf32> to vector<128xf32>
    %8 = vector.shape_cast %7 : vector<128xf32> to vector<1x128xf32>
    %9 = vector.shape_cast %5 : vector<1x128xf32> to vector<1x128xf32>
    %10 = vector.broadcast %9 : vector<1x128xf32> to vector<8x128xf32>
    %c0_7 = arith.constant 0 : index
    %c0_8 = arith.constant 0 : index
    %c0_9 = arith.constant 0 : index
    %11 = vector.load %arg4[%c0_7, %c0_8, %c0_9] : memref<1x8x128xf32, #tpu.memory_space<vmem>>, vector<1x8x128xf32>
    %12 = vector.shape_cast %11 : vector<1x8x128xf32> to vector<8x128xf32>
    %13 = vector.shape_cast %10 : vector<8x128xf32> to vector<1x8x128xf32>
    tpu.vector_store %arg4[%c0_7, %c0_8, %c0_9], %13 {strides = array<i32>} : memref<1x8x128xf32, #tpu.memory_space<vmem>>, vector<1x8x128xf32>,
    %14 = vector.shape_cast %8 : vector<1x128xf32> to vector<1x128xf32>
    %15 = vector.broadcast %14 : vector<1x128xf32> to vector<8x128xf32>
    %c0_10 = arith.constant 0 : index
    %c0_11 = arith.constant 0 : index
    %c0_12 = arith.constant 0 : index
    %16 = vector.load %arg5[%c0_10, %c0_11, %c0_12] : memref<1x8x128xf32, #tpu.memory_space<vmem>>, vector<1x8x128xf32>
    %17 = vector.shape_cast %16 : vector<1x8x128xf32> to vector<8x128xf32>
    %18 = vector.shape_cast %15 : vector<8x128xf32> to vector<1x8x128xf32>
    tpu.vector_store %arg5[%c0_10, %c0_11, %c0_12], %18 {strides = array<i32>} : memref<1x8x128xf32, #tpu.memory_space<vmem>>, vector<1x8x128xf32>,
    return
  }
  func.func @transform_0(%arg0: i32) -> (i32, i32) {
    %c0_i32 = arith.constant 0 : i32
    %c0_i32_0 = arith.constant 0 : i32
    return %arg0, %c0_i32 : i32, i32
  }
  func.func @transform_1(%arg0: i32) -> (i32, i32) {
    %c0_i32 = arith.constant 0 : i32
    %c0_i32_0 = arith.constant 0 : i32
    %c0_i32_1 = arith.constant 0 : i32
    return %c0_i32, %c0_i32_0 : i32, i32
  }
  func.func @transform_2(%arg0: i32) -> (i32, i32) {
    %c0_i32 = arith.constant 0 : i32
    %c0_i32_0 = arith.constant 0 : i32
    return %arg0, %c0_i32 : i32, i32
  }
  func.func @transform_3(%arg0: i32) -> (i32, i32, i32) {
    %c0_i32 = arith.constant 0 : i32
    %c0_i32_0 = arith.constant 0 : i32
    %c0_i32_1 = arith.constant 0 : i32
    return %arg0, %c0_i32, %c0_i32_0 : i32, i32, i32
  }
  func.func @transform_4(%arg0: i32) -> (i32, i32, i32) {
    %c0_i32 = arith.constant 0 : i32
    %c0_i32_0 = arith.constant 0 : i32
    %c0_i32_1 = arith.constant 0 : i32
    return %arg0, %c0_i32, %c0_i32_0 : i32, i32, i32
  }
}

</mosaic_0001>

<llo_original>
// kernel: tpu_custom_call.1
$region0: #{tpu_custom_call.1}
  #allocation0 [shape = 'u32[]', space=smem, size = 0x4, offset = 0x4, fixed_abs, tag = 'smem constant byte address 0x4 - core index']
  #allocation1 [shape = 'u32[72,128]{1,0:T(1,128)}', space=vmem, size = 0x9000, scoped, tag = 'internal scratch']
  %s0 = inlined_call_operand.hbm [shape: bf16[64,256], index: 0, kind: input, shape index: {}]
  %s1 = inlined_call_operand.hbm [shape: bf16[256,128], index: 1, kind: input, shape index: {}]
  %s2 = inlined_call_operand.hbm [shape: f32[64,128], index: 2, kind: output, shape index: {0}]
  %s3 = inlined_call_operand.hbm [shape: f32[1,8,128], index: 3, kind: output, shape index: {1}]
  %s4 = inlined_call_operand.hbm [shape: f32[1,8,128], index: 4, kind: output, shape index: {2}]
  %5 = xla_tuple %s2, %s3, %s4
  %s6 = sld [smem:[#allocation0]]
  $region42: #{tpu_custom_call.1} parent=0
    _
  %s8 = ssub.s32 1, %s6
  %s9 = scalar_select 0, %s8, %s6
  $region1: #{tpu_custom_call.1} parent=0
    #allocation2 [shape = 'u8[32768]{0}', space=vmem, size = 0x8000, scoped, tag = 'input window, operand 0, single buffered']
    #allocation3 [shape = 's32[1]{0}', space=sflag, size = 0x4, scoped, tag = 'scoped memory for tpu_custom_call.1']
    #allocation4 [shape = 's32[1]{0}', space=sflag, size = 0x4, scoped, tag = 'scoped memory for tpu_custom_call.1']
    #allocation5 [shape = 'u8[65536]{0}', space=vmem, size = 0x10000, scoped, tag = 'input window, operand 1, single buffered']
    #allocation6 [shape = 's32[1]{0}', space=sflag, size = 0x4, scoped, tag = 'scoped memory for tpu_custom_call.1']
    #allocation7 [shape = 'u8[32768]{0}', space=vmem, size = 0x8000, scoped, tag = 'output window, operand 0, single buffered']
    #allocation8 [shape = 'u8[4096]{0}', space=vmem, size = 0x1000, scoped, tag = 'output window, operand 1, single buffered']
    #allocation9 [shape = 's32[1]{0}', space=sflag, size = 0x4, scoped, tag = 'scoped memory for tpu_custom_call.1']
    #allocation10 [shape = 'u8[4096]{0}', space=vmem, size = 0x1000, scoped, tag = 'output window, operand 2, single buffered']
    %10 = vsyncpa [#allocation3], 0
    %11 = vsyncpa [#allocation6], 0
    %12 = vsyncpa [#allocation4], 0
    %13 = vsyncpa [#allocation9], 0
    // Predicated region
    $region2: #{tpu_custom_call.1} parent=1 // pred_check
      _
    $region3: #{tpu_custom_call.1} parent=1 // pred_check_branch
      %15 = sbr.rel (0) target = $region5
    $region4: #{tpu_custom_call.1} parent=1 // pred_region
      %17 = vsyncadd [#allocation3], 0
      %s18 = sshll.u32 %s0, 4
      %s19 = int_to_ptr.hbm [resolvable:$true] %s18
      %s20 = sshll.u32 [#allocation2], 4
      %s21 = int_to_ptr.vmem [resolvable:$true] %s20
      %26 = dma.hbm_to_vmem [thread:$0]  %s19, 1024, %s21, [#allocation3], 128, 128, 8
    $region5: #{tpu_custom_call.1} parent=1 // pred_fallthru
      _
    // Predicated region
    $region6: #{tpu_custom_call.1} parent=1 // pred_check
      _
    $region7: #{tpu_custom_call.1} parent=1 // pred_check_branch
      %28 = sbr.rel (0) target = $region9
    $region8: #{tpu_custom_call.1} parent=1 // pred_region
      %30 = vsyncadd [#allocation6], 0
      %s31 = sshll.u32 %s1, 4
      %s32 = int_to_ptr.hbm [resolvable:$true] %s31
      %s33 = sshll.u32 [#allocation5], 4
      %s34 = int_to_ptr.vmem [resolvable:$true] %s33
      %39 = dma.hbm_to_vmem [thread:$0]  %s32, 2048, %s34, [#allocation6], 64, 64, 4
    $region9: #{tpu_custom_call.1} parent=1 // pred_fallthru
      _
    // Predicated region
    $region10: #{tpu_custom_call.1} parent=1 // pred_check
      _
    $region11: #{tpu_custom_call.1} parent=1 // pred_check_branch
      %41 = sbr.rel (0) target = $region13
    $region12: #{tpu_custom_call.1} parent=1 // pred_region
      %43 = dma.done [#allocation3], 1024
    $region13: #{tpu_custom_call.1} parent=1 // pred_fallthru
      _
    // Predicated region
    $region14: #{tpu_custom_call.1} parent=1 // pred_check
      _
    $region15: #{tpu_custom_call.1} parent=1 // pred_check_branch
      %45 = sbr.rel (0) target = $region17
    $region16: #{tpu_custom_call.1} parent=1 // pred_region
      %47 = dma.done [#allocation6], 2048
    $region17: #{tpu_custom_call.1} parent=1 // pred_fallthru
      _
    %v48 = vld [vmem:[#allocation2] sm:$0xff]
    %v49 = vld [vmem:[#allocation2 + $0x8] sm:$0xff]
    %v50 = vld [vmem:[#allocation2 + $0x10] sm:$0xff]
    %v51 = vld [vmem:[#allocation2 + $0x18] sm:$0xff]
    %v52 = vld [vmem:[#allocation2 + $0x20] sm:$0xff]
    %v53 = vld [vmem:[#allocation2 + $0x28] sm:$0xff]
    %v54 = vld [vmem:[#allocation2 + $0x30] sm:$0xff]
    %v55 = vld [vmem:[#allocation2 + $0x38] sm:$0xff]
    %v56 = vld [vmem:[#allocation5] sm:$0xf]
    %v57 = vld [vmem:[#allocation5 + $0x4] sm:$0xf]
    %v58 = vld [vmem:[#allocation5 + $0x8] sm:$0xf]
    %v59 = vld [vmem:[#allocation5 + $0xc] sm:$0xf]
    %v60 = vld [vmem:[#allocation5 + $0x10] sm:$0xf]
    %v61 = vld [vmem:[#allocation5 + $0x14] sm:$0xf]
    %v62 = vld [vmem:[#allocation5 + $0x18] sm:$0xf]
    %v63 = vld [vmem:[#allocation5 + $0x1c] sm:$0xf]
    %v64 = vld [vmem:[#allocation5 + $0x20] sm:$0xf]
    %v65 = vld [vmem:[#allocation5 + $0x24] sm:$0xf]
    %v66 = vld [vmem:[#allocation5 + $0x28] sm:$0xf]
    %v67 = vld [vmem:[#allocation5 + $0x2c] sm:$0xf]
    %v68 = vld [vmem:[#allocation5 + $0x30] sm:$0xf]
    %v69 = vld [vmem:[#allocation5 + $0x34] sm:$0xf]
    %v70 = vld [vmem:[#allocation5 + $0x38] sm:$0xf]
    %v71 = vld [vmem:[#allocation5 + $0x3c] sm:$0xf]
    %v72 = vld [vmem:[#allocation5 + $0x40] sm:$0xf]
    %v73 = vld [vmem:[#allocation5 + $0x44] sm:$0xf]
    %v74 = vld [vmem:[#allocation5 + $0x48] sm:$0xf]
    %v75 = vld [vmem:[#allocation5 + $0x4c] sm:$0xf]
    %v76 = vld [vmem:[#allocation5 + $0x50] sm:$0xf]
    %v77 = vld [vmem:[#allocation5 + $0x54] sm:$0xf]
    %v78 = vld [vmem:[#allocation5 + $0x58] sm:$0xf]
    %v79 = vld [vmem:[#allocation5 + $0x5c] sm:$0xf]
    %v80 = vld [vmem:[#allocation5 + $0x60] sm:$0xf]
    %v81 = vld [vmem:[#allocation5 + $0x64] sm:$0xf]
    %v82 = vld [vmem:[#allocation5 + $0x68] sm:$0xf]
    %v83 = vld [vmem:[#allocation5 + $0x6c] sm:$0xf]
    %v84 = vld [vmem:[#allocation5 + $0x70] sm:$0xf]
    %v85 = vld [vmem:[#allocation5 + $0x74] sm:$0xf]
    %v86 = vld [vmem:[#allocation5 + $0x78] sm:$0xf]
    %v87 = vld [vmem:[#allocation5 + $0x7c] sm:$0xf]
    %v96 = vunpack.c.l.b16 %v48
    %v97 = vunpack.c.h.b16 %v48
    %v98 = vunpack.c.l.b16 %v49
    %v99 = vunpack.c.h.b16 %v49
    %v100 = vunpack.c.l.b16 %v50
    %v101 = vunpack.c.h.b16 %v50
    %v102 = vunpack.c.l.b16 %v51
    %v103 = vunpack.c.h.b16 %v51
    %v104 = vunpack.c.l.b16 %v52
    %v105 = vunpack.c.h.b16 %v52
    %v106 = vunpack.c.l.b16 %v53
    %v107 = vunpack.c.h.b16 %v53
    %v108 = vunpack.c.l.b16 %v54
    %v109 = vunpack.c.h.b16 %v54
    %v110 = vunpack.c.l.b16 %v55
    %v111 = vunpack.c.h.b16 %v55
    %v112 = vpack.c.b16 %v98, %v96
    %v113 = vpack.c.b16 %v99, %v97
    %v114 = vpack.c.b16 %v102, %v100
    %v115 = vpack.c.b16 %v103, %v101
    %v116 = vpack.c.b16 %v106, %v104
    %v117 = vpack.c.b16 %v107, %v105
    %v118 = vpack.c.b16 %v110, %v108
    %v119 = vpack.c.b16 %v111, %v109
    %v160 = vunpack.c.l.b16 %v56
    %v161 = vunpack.c.l.b16 %v57
    %v162 = vunpack.c.l.b16 %v58
    %v163 = vunpack.c.l.b16 %v59
    %v164 = vunpack.c.l.b16 %v60
    %v165 = vunpack.c.l.b16 %v61
    %v166 = vunpack.c.l.b16 %v62
    %v167 = vunpack.c.l.b16 %v63
    %v168 = vunpack.c.l.b16 %v64
    %v169 = vunpack.c.l.b16 %v65
    %v170 = vunpack.c.l.b16 %v66
    %v171 = vunpack.c.l.b16 %v67
    %v172 = vunpack.c.l.b16 %v68
    %v173 = vunpack.c.l.b16 %v69
    %v174 = vunpack.c.l.b16 %v70
    %v175 = vunpack.c.l.b16 %v71
    %v176 = vunpack.c.l.b16 %v72
    %v177 = vunpack.c.l.b16 %v73
    %v178 = vunpack.c.l.b16 %v74
    %v179 = vunpack.c.l.b16 %v75
    %v180 = vunpack.c.l.b16 %v76
    %v181 = vunpack.c.l.b16 %v77
    %v182 = vunpack.c.l.b16 %v78
    %v183 = vunpack.c.l.b16 %v79
    %v184 = vunpack.c.l.b16 %v80
    %v185 = vunpack.c.l.b16 %v81
    %v186 = vunpack.c.l.b16 %v82
    %v187 = vunpack.c.l.b16 %v83
    %v188 = vunpack.c.l.b16 %v84
    %v189 = vunpack.c.l.b16 %v85
    %v190 = vunpack.c.l.b16 %v86
    %v191 = vunpack.c.l.b16 %v87
    %v192 = vpack.c.b16 %v161, %v160
    %v193 = vpack.c.b16 %v163, %v162
    %v194 = vpack.c.b16 %v165, %v164
    %v195 = vpack.c.b16 %v167, %v166
    %v196 = vpack.c.b16 %v169, %v168
    %v197 = vpack.c.b16 %v171, %v170
    %v198 = vpack.c.b16 %v173, %v172
    %v199 = vpack.c.b16 %v175, %v174
    %v200 = vpack.c.b16 %v177, %v176
    %v201 = vpack.c.b16 %v179, %v178
    %v202 = vpack.c.b16 %v181, %v180
    %v203 = vpack.c.b16 %v183, %v182
    %v204 = vpack.c.b16 %v185, %v184
    %v205 = vpack.c.b16 %v187, %v186
    %v206 = vpack.c.b16 %v189, %v188
    %v207 = vpack.c.b16 %v191, %v190
    %224 = vmatpush.bf16.msra.mxu0 %v199
    %225 = vmatpush.bf16.msra.mxu0 %v198
    %226 = vmatpush.bf16.msra.mxu0 %v197
    %227 = vmatpush.bf16.msra.mxu0 %v196
    %228 = vmatpush.bf16.msra.mxu0 %v195
    %229 = vmatpush.bf16.msra.mxu0 %v194
    %230 = vmatpush.bf16.msra.mxu0 %v193
    %231 = vmatpush.bf16.msra.mxu0 %v192
    %232 = vmatmul.bf16.gmra.mxu0 %v112
    %v233 = vpop.f32.mrf.mxu0
    %v234 = vadd.f32 0.0, %v233
    %v235 = vpop.f32.mrf.mxu0
    %v236 = vadd.f32 0.0, %v235
    %237 = vmatmul.bf16.gmra.mxu0 %v114
    %v238 = vpop.f32.mrf.mxu0
    %v239 = vadd.f32 0.0, %v238
    %v240 = vpop.f32.mrf.mxu0
    %v241 = vadd.f32 0.0, %v240
    %242 = vmatmul.bf16.gmra.mxu0 %v116
    %v243 = vpop.f32.mrf.mxu0
    %v244 = vadd.f32 0.0, %v243
    %v245 = vpop.f32.mrf.mxu0
    %v246 = vadd.f32 0.0, %v245
    %247 = vmatmul.bf16.gmra.mxu0 %v118
    %v248 = vpop.f32.mrf.mxu0
    %v249 = vadd.f32 0.0, %v248
    %v250 = vpop.f32.mrf.mxu0
    %v251 = vadd.f32 0.0, %v250
    %252 = vdwg.mxu0
    %253 = vmatpush.bf16.msra.mxu0 %v207
    %254 = vmatpush.bf16.msra.mxu0 %v206
    %255 = vmatpush.bf16.msra.mxu0 %v205
    %256 = vmatpush.bf16.msra.mxu0 %v204
    %257 = vmatpush.bf16.msra.mxu0 %v203
    %258 = vmatpush.bf16.msra.mxu0 %v202
    %259 = vmatpush.bf16.msra.mxu0 %v201
    %260 = vmatpush.bf16.msra.mxu0 %v200
    %261 = vmatmul.bf16.gmra.mxu0 %v113
    %v262 = vpop.f32.mrf.mxu0
    %v263 = vadd.f32 %v234, %v262
    %v264 = vpop.f32.mrf.mxu0
    %v265 = vadd.f32 %v236, %v264
    %266 = vmatmul.bf16.gmra.mxu0 %v115
    %v267 = vpop.f32.mrf.mxu0
    %v268 = vadd.f32 %v239, %v267
    %v269 = vpop.f32.mrf.mxu0
    %v270 = vadd.f32 %v241, %v269
    %271 = vmatmul.bf16.gmra.mxu0 %v117
    %v272 = vpop.f32.mrf.mxu0
    %v273 = vadd.f32 %v244, %v272
    %v274 = vpop.f32.mrf.mxu0
    %v275 = vadd.f32 %v246, %v274
    %276 = vmatmul.bf16.gmra.mxu0 %v119
    %v277 = vpop.f32.mrf.mxu0
    %v278 = vadd.f32 %v249, %v277
    %v279 = vpop.f32.mrf.mxu0
    %v280 = vadd.f32 %v251, %v279
    %281 = vdwg.mxu0
    %282 = vst [vmem:[#allocation7] sm:$0xff] %v263
    %283 = vst [vmem:[#allocation7 + $0x8] sm:$0xff] %v265
    %284 = vst [vmem:[#allocation7 + $0x10] sm:$0xff] %v268
    %285 = vst [vmem:[#allocation7 + $0x18] sm:$0xff] %v270
    %286 = vst [vmem:[#allocation7 + $0x20] sm:$0xff] %v273
    %287 = vst [vmem:[#allocation7 + $0x28] sm:$0xff] %v275
    %288 = vst [vmem:[#allocation7 + $0x30] sm:$0xff] %v278
    %289 = vst [vmem:[#allocation7 + $0x38] sm:$0xff] %v280
    %v290 = vadd.f32 %v263, %v265
    %v291 = vadd.f32 %v290, %v268
    %v292 = vadd.f32 %v291, %v270
    %v293 = vadd.f32 %v292, %v273
    %v294 = vadd.f32 %v293, %v275
    %v295 = vadd.f32 %v294, %v278
    %v296 = vadd.f32 %v295, %v280
    %v297 = vrot.slane %v296, 4
    %v298 = vadd.f32 %v296, %v297
    %v299 = vrot.slane %v298, 2
    %v300 = vadd.f32 %v298, %v299
    %v301 = vrot.slane %v300, 1
    %v302 = vadd.f32 %v300, %v301
    %v303 = vmul.f32 %v263, %v263
    %v304 = vmul.f32 %v265, %v265
    %v305 = vmul.f32 %v268, %v268
    %v306 = vmul.f32 %v270, %v270
    %v307 = vmul.f32 %v273, %v273
    %v308 = vmul.f32 %v275, %v275
    %v309 = vmul.f32 %v278, %v278
    %v310 = vmul.f32 %v280, %v280
    %v311 = vadd.f32 %v303, %v304
    %v312 = vadd.f32 %v311, %v305
    %v313 = vadd.f32 %v312, %v306
    %v314 = vadd.f32 %v313, %v307
    %v315 = vadd.f32 %v314, %v308
    %v316 = vadd.f32 %v315, %v309
    %v317 = vadd.f32 %v316, %v310
    %v318 = vrot.slane %v317, 4
    %v319 = vadd.f32 %v317, %v318
    %v320 = vrot.slane %v319, 2
    %v321 = vadd.f32 %v319, %v320
    %v322 = vrot.slane %v321, 1
    %v323 = vadd.f32 %v321, %v322
    %324 = vst [vmem:[#allocation8] sm:$0xff] %v302
    %325 = vst [vmem:[#allocation10] sm:$0xff] %v323
    // Predicated region
    $region18: #{tpu_custom_call.1} parent=1 // pred_check
      _
    $region19: #{tpu_custom_call.1} parent=1 // pred_check_branch
      %327 = sbr.rel (0) target = $region21
    $region20: #{tpu_custom_call.1} parent=1 // pred_region
      %329 = vsyncadd [#allocation4], 0
      %s330 = sshll.u32 [#allocation7], 4
      %s331 = int_to_ptr.vmem [resolvable:$true] %s330
      %s332 = sshll.u32 %s2, 4
      %s333 = int_to_ptr.hbm [resolvable:$true] %s332
      %338 = dma.vmem_to_hbm [thread:$0]  %s331, 1024, %s333, [#allocation4], 128, 128, 8
    $region21: #{tpu_custom_call.1} parent=1 // pred_fallthru
      _
    // Predicated region
    $region22: #{tpu_custom_call.1} parent=1 // pred_check
      _
    $region23: #{tpu_custom_call.1} parent=1 // pred_check_branch
      %340 = sbr.rel (0) target = $region25
    $region24: #{tpu_custom_call.1} parent=1 // pred_region
      %342 = vsyncadd [#allocation9], 0
      %s344 = sshll.u32 [#allocation8], 4
      %s345 = int_to_ptr.vmem [resolvable:$true] %s344
      %s346 = sshll.u32 %s3, 4
      %s347 = int_to_ptr.hbm [resolvable:$true] %s346
      %349 = dma.vmem_to_hbm [thread:$0]  %s345, 128, %s347, [#allocation9]
    $region25: #{tpu_custom_call.1} parent=1 // pred_fallthru
      _
    // Predicated region
    $region26: #{tpu_custom_call.1} parent=1 // pred_check
      _
    $region27: #{tpu_custom_call.1} parent=1 // pred_check_branch
      %351 = sbr.rel (0) target = $region29
    $region28: #{tpu_custom_call.1} parent=1 // pred_region
      %353 = vsyncadd [#allocation9], 0
      %s355 = sshll.u32 [#allocation10], 4
      %s356 = int_to_ptr.vmem [resolvable:$true] %s355
      %s357 = sshll.u32 %s4, 4
      %s358 = int_to_ptr.hbm [resolvable:$true] %s357
      %360 = dma.vmem_to_hbm [thread:$0]  %s356, 128, %s358, [#allocation9]
    $region29: #{tpu_custom_call.1} parent=1 // pred_fallthru
      _
    // Predicated region
    $region30: #{tpu_custom_call.1} parent=1 // pred_check
      _
    $region31: #{tpu_custom_call.1} parent=1 // pred_check_branch
      %362 = sbr.rel (0) target = $region33
    $region32: #{tpu_custom_call.1} parent=1 // pred_region
      %364 = dma.done [#allocation4], 1024
    $region33: #{tpu_custom_call.1} parent=1 // pred_fallthru
      _
    // Predicated region
    $region34: #{tpu_custom_call.1} parent=1 // pred_check
      _
    $region35: #{tpu_custom_call.1} parent=1 // pred_check_branch
      %366 = sbr.rel (0) target = $region37
    $region36: #{tpu_custom_call.1} parent=1 // pred_region
      %368 = dma.done [#allocation9], 128
    $region37: #{tpu_custom_call.1} parent=1 // pred_fallthru
      _
    // Predicated region
    $region38: #{tpu_custom_call.1} parent=1 // pred_check
      _
    $region39: #{tpu_custom_call.1} parent=1 // pred_check_branch
      %370 = sbr.rel (0) target = $region41
    $region40: #{tpu_custom_call.1} parent=1 // pred_region
      %372 = dma.done [#allocation9], 128
    $region41: #{tpu_custom_call.1} parent=1 // pred_fallthru
      _
    %373 = vsyncpa [#allocation3], 1
    %374 = vsyncpa [#allocation6], 1
    %375 = vsyncpa [#allocation4], 1
    %376 = vsyncpa [#allocation9], 1

</llo_original>
